<compile_context>
chip_gen: v7x
topology: tpu7x:2x2x1
jax: 0.10.0
libtpu: 0.0.40
codegen_flags: <defaults>
</compile_context>

<pallas_src>
import jax
import jax.numpy as jnp
from jax.experimental import pallas as pl
from jax.experimental.pallas import tpu as pltpu


def _critic_kernel(s_ref, a_ref, w1s_ref, w1a_ref, b1_ref,
                   w2_ref, b2_ref, wq_ref, bq_ref, o_ref):
    cdtype = w1s_ref.dtype                      # bf16 (or f32) compute dtype

    # fc1: concat([state, action]) fused as a split matmul; f32 MXU accumulate.
    h1 = jnp.dot(s_ref[...].astype(cdtype), w1s_ref[...],
                 preferred_element_type=jnp.float32)
    h1 = h1 + jnp.dot(a_ref[...].astype(cdtype), w1a_ref[...],
                      preferred_element_type=jnp.float32)
    h1 = jnp.maximum(h1 + b1_ref[...], 0.0)

    # fc2 + relu.
    h2 = jnp.dot(h1.astype(cdtype), w2_ref[...],
                 preferred_element_type=jnp.float32)
    h2 = jnp.maximum(h2 + b2_ref[...], 0.0)

    # q1 head (out_features = 1) as a VPU multiply + XLU lane reduction.
    wq = wq_ref[...].astype(jnp.float32)        # (1, fc2) row
    q = jnp.sum(h2 * wq, axis=-1, keepdims=True)
    o_ref[...] = q + bq_ref[pl.program_id(0)]   # bq: SMEM scalar, per critic


def _round_up(x, m):
    return ((x + m - 1) // m) * m


def _pick_batch_tile(B, block_b):
    """Batch tile: one block for small B, MXU/lane-aligned 256-multiples after."""
    block_b = max(256, _round_up(block_b, 256))
    if B <= 256:
        return B                               # single block; tb == full extent
    if B <= 2 * block_b:
        # ~2 grid steps so the parallel batch axis can span both v7x TCs.
        return min(block_b, _round_up(pl.cdiv(B, 2), 256))
    return block_b


def critic_forward(state, action, params, *, block_b=512):
    """Fused forward pass for C stacked critics. Returns (C, B, 1) q-values."""
    w1s, w1a, b1, w2, b2, wq, bq = params
    C, din, fc1 = w1s.shape
    adim = w1a.shape[1]
    fc2 = w2.shape[2]
    B = state.shape[0]
    assert state.shape[1] == din and action.shape[1] == adim

    tb = _pick_batch_tile(B, block_b)
    nb = pl.cdiv(B, tb)

    # Batch-tiled activations; weights replicated across batch, indexed by critic.
    bt = lambda cols: pl.BlockSpec((tb, cols), lambda c, i: (i, 0))
    wspec = lambda r, cols: pl.BlockSpec((None, r, cols), lambda c, i: (c, 0, 0))

    wbytes = jnp.dtype(w1s.dtype).itemsize
    weight_elems = (din + adim) * fc1 + fc1 * fc2 + fc2 + fc1 + fc2
    flops = 2 * C * B * ((din + adim) * fc1 + fc1 * fc2 + fc2)
    bytes_accessed = (C * weight_elems * max(wbytes, 4)
                      + C * B * (din + adim) * 4 + C * B * 4)

    # Explicit scoped-VMEM limit (v5e default is only 16 MiB); generous margin.
    est = (2 * tb * (din + adim) * 4            # double-buffered activation tiles
           + 2 * weight_elems * max(wbytes, 4)  # weights + biases (+ pad slack)
           + 2 * tb * 128 * 4                   # lane-padded (tb, 1) output tiles
           + 2 * tb * (fc1 + fc2) * 4)          # h1 / h2 intermediates
    vmem_limit = int(min(max(2 * est, 16 * 1024 * 1024), 64 * 1024 * 1024))

    return pl.pallas_call(
        _critic_kernel,
        out_shape=jax.ShapeDtypeStruct((C, B, 1), jnp.float32),
        grid=(C, nb),
        in_specs=[
            bt(din),                 # state
            bt(adim),                # action
            wspec(din, fc1),         # W1[:input_dims]
            wspec(adim, fc1),        # W1[input_dims:]
            wspec(1, fc1),           # b1
            wspec(fc1, fc2),         # W2
            wspec(1, fc2),           # b2
            wspec(1, fc2),           # Wq as a row
            pl.BlockSpec(memory_space=pltpu.MemorySpace.SMEM),   # bq (C,) scalars
        ],
        out_specs=pl.BlockSpec((None, tb, 1), lambda c, i: (c, i, 0)),
        compiler_params=pltpu.CompilerParams(
            dimension_semantics=("parallel", "parallel"),
            vmem_limit_bytes=vmem_limit),
        cost_estimate=pl.CostEstimate(flops=int(flops), transcendentals=0,
                                      bytes_accessed=int(bytes_accessed)),
    )(state, action, w1s, w1a, b1, w2, b2, wq, bq)


def init_critic_params(key, input_dims, action_dim, fc1_dims, fc2_dims,
                       num_critics=1, weight_dtype=jnp.bfloat16):
    """PyTorch-Linear-style init U(-1/sqrt(fan_in), 1/sqrt(fan_in)), stacked over
    `num_critics`. W1 is drawn jointly over (input_dims+action_dim) then split
    into the state/action slices the fused kernel consumes; Wq stored as a row.
    Matmul weights are stored in bf16 (halves DMA, doubles MXU rate); biases f32.
    """
    d_in = input_dims + action_dim

    def linear(key, fan_in, fan_out):
        kw, kb = jax.random.split(key)
        bound = 1.0 / float(fan_in) ** 0.5
        w = jax.random.uniform(kw, (fan_in, fan_out), jnp.float32, -bound, bound)
        b = jax.random.uniform(kb, (1, fan_out), jnp.float32, -bound, bound)
        return w, b

    w1s_l, w1a_l, b1_l, w2_l, b2_l, wq_l, bq_l = [], [], [], [], [], [], []
    for ck in jax.random.split(key, num_critics):
        k1, k2, k3 = jax.random.split(ck, 3)
        w1, b1 = linear(k1, d_in, fc1_dims)
        w2, b2 = linear(k2, fc1_dims, fc2_dims)
        wq, bq = linear(k3, fc2_dims, 1)
        w1s_l.append(w1[:input_dims]); w1a_l.append(w1[input_dims:]); b1_l.append(b1)
        w2_l.append(w2); b2_l.append(b2)
        wq_l.append(wq.T)                       # (1, fc2) row
        bq_l.append(bq[0, 0])

    stack = lambda xs, dt: jnp.stack(xs).astype(dt)
    return (stack(w1s_l, weight_dtype), stack(w1a_l, weight_dtype),
            stack(b1_l, jnp.float32), stack(w2_l, weight_dtype),
            stack(b2_l, jnp.float32), stack(wq_l, weight_dtype),
            jnp.stack(bq_l).astype(jnp.float32))


def _reference_forward(state, action, params):
    """Pure-JAX reference mirroring the kernel's cast points (bf16 -> f32 math)."""
    w1s, w1a, b1, w2, b2, wq, bq = params
    f32 = jnp.float32
    x = jnp.concatenate([state, action], axis=1).astype(w1s.dtype).astype(f32)
    w1 = jnp.concatenate([w1s, w1a], axis=1).astype(f32)        # (C, d_in, fc1)
    h1 = jnp.maximum(jnp.einsum("bi,cio->cbo", x, w1) + b1, 0.0)
    h1 = h1.astype(w2.dtype).astype(f32)
    h2 = jnp.maximum(jnp.einsum("cbi,cio->cbo", h1, w2.astype(f32)) + b2, 0.0)
    q = jnp.sum(h2 * wq.astype(f32), axis=-1, keepdims=True)
    return q + bq[:, None, None]


# TODO(synk): the Adam optimizer, checkpoint save/load, and device placement in
# the PyTorch module are host-side concerns with no Pallas-kernel equivalent.

if __name__ == "__main__":
    # Shapes consistent with the module: input_dims=[8], action_dim=4,
    # fc1_dims=32, fc2_dims=32, SAC twin critics (C=2), batch=8.
    INPUT_DIMS, ACTION_DIM, FC1, FC2, NUM_CRITICS = 8, 4, 32, 32, 2
    B = 8

    key = jax.random.PRNGKey(0)
    k_state, k_action, k_params = jax.random.split(key, 3)
    state = jax.random.normal(k_state, (B, INPUT_DIMS), jnp.float32)
    action = jax.random.normal(k_action, (B, ACTION_DIM), jnp.float32)
    params = init_critic_params(k_params, INPUT_DIMS, ACTION_DIM, FC1, FC2,
                                num_critics=NUM_CRITICS)

    q = critic_forward(state, action, params)
    jax.block_until_ready(q)
    q_ref = _reference_forward(state, action, params)
    assert q.shape == (NUM_CRITICS, B, 1)
    assert jnp.allclose(q, q_ref, atol=1e-3, rtol=1e-3), \
        float(jnp.max(jnp.abs(q - q_ref)))

    # Ragged batch exercising the multi-block grid (tb=256, padded last tile).
    B2 = 260
    k2s, k2a = jax.random.split(jax.random.PRNGKey(1))
    state2 = jax.random.normal(k2s, (B2, INPUT_DIMS), jnp.float32)
    action2 = jax.random.normal(k2a, (B2, ACTION_DIM), jnp.float32)
    q2 = critic_forward(state2, action2, params)
    jax.block_until_ready(q2)
    q2_ref = _reference_forward(state2, action2, params)
    assert q2.shape == (NUM_CRITICS, B2, 1)
    assert jnp.allclose(q2, q2_ref, atol=1e-3, rtol=1e-3), \
        float(jnp.max(jnp.abs(q2 - q2_ref)))

    print("KERNEL_OK")
</pallas_src>

<mosaic_0001>
module attributes {stable_mosaic.version = 11 : i64} {
  func.func @_critic_kernel(%arg0: i32, %arg1: i32, %arg2: memref<8x8xf32, #tpu.memory_space<vmem>>, %arg3: memref<8x4xf32, #tpu.memory_space<vmem>>, %arg4: memref<1x8x32xbf16, #tpu.memory_space<vmem>>, %arg5: memref<1x4x32xbf16, #tpu.memory_space<vmem>>, %arg6: memref<1x1x32xf32, #tpu.memory_space<vmem>>, %arg7: memref<1x32x32xbf16, #tpu.memory_space<vmem>>, %arg8: memref<1x1x32xf32, #tpu.memory_space<vmem>>, %arg9: memref<1x1x32xbf16, #tpu.memory_space<vmem>>, %arg10: memref<2xf32, #tpu.memory_space<smem>>, %arg11: memref<1x8x1xf32, #tpu.memory_space<vmem>>) attributes {dimension_semantics = [#tpu.dimension_semantics<parallel>, #tpu.dimension_semantics<parallel>], iteration_bounds = array<i64: 2, 1>, scalar_prefetch = 0 : i64, scratch_operands = 0 : i64, tpu.core_type = #tpu.core_type<tc>, window_params = [{transform_indices = @transform_0, window_bounds = array<i64: 8, 8>}, {transform_indices = @transform_1, window_bounds = array<i64: 8, 4>}, {transform_indices = @transform_2, window_bounds = array<i64: 1, 8, 32>}, {transform_indices = @transform_3, window_bounds = array<i64: 1, 4, 32>}, {transform_indices = @transform_4, window_bounds = array<i64: 1, 1, 32>}, {transform_indices = @transform_5, window_bounds = array<i64: 1, 32, 32>}, {transform_indices = @transform_6, window_bounds = array<i64: 1, 1, 32>}, {transform_indices = @transform_7, window_bounds = array<i64: 1, 1, 32>}, {transform_indices = @transform_8, window_bounds = array<i64: 2>}, {transform_indices = @transform_9, window_bounds = array<i64: 1, 8, 1>}]} {
    %c0 = arith.constant 0 : index
    %c0_0 = arith.constant 0 : index
    %0 = vector.load %arg2[%c0, %c0_0] : memref<8x8xf32, #tpu.memory_space<vmem>>, vector<8x8xf32>
    %1 = arith.truncf %0 : vector<8x8xf32> to vector<8x8xbf16>
    %c0_1 = arith.constant 0 : index
    %c0_2 = arith.constant 0 : index
    %c0_3 = arith.constant 0 : index
    %2 = vector.load %arg4[%c0_1, %c0_2, %c0_3] : memref<1x8x32xbf16, #tpu.memory_space<vmem>>, vector<1x8x32xbf16>
    %3 = vector.shape_cast %2 : vector<1x8x32xbf16> to vector<8x32xbf16>
    %cst = arith.constant dense<0.000000e+00> : vector<8x32xf32>
    %4 = tpu.matmul %1, %3, %cst {dimension_numbers = #tpu.dot_dimension_numbers<[1], [0], [0], [1], [0, 0, 1, 1], [], []>} : vector<8x8xbf16>, vector<8x32xbf16>, vector<8x32xf32> -> vector<8x32xf32>
    %c0_4 = arith.constant 0 : index
    %c0_5 = arith.constant 0 : index
    %5 = vector.load %arg3[%c0_4, %c0_5] : memref<8x4xf32, #tpu.memory_space<vmem>>, vector<8x4xf32>
    %6 = arith.truncf %5 : vector<8x4xf32> to vector<8x4xbf16>
    %c0_6 = arith.constant 0 : index
    %c0_7 = arith.constant 0 : index
    %c0_8 = arith.constant 0 : index
    %7 = vector.load %arg5[%c0_6, %c0_7, %c0_8] : memref<1x4x32xbf16, #tpu.memory_space<vmem>>, vector<1x4x32xbf16>
    %8 = vector.shape_cast %7 : vector<1x4x32xbf16> to vector<4x32xbf16>
    %cst_9 = arith.constant dense<0.000000e+00> : vector<8x32xf32>
    %9 = tpu.matmul %6, %8, %cst_9 {dimension_numbers = #tpu.dot_dimension_numbers<[1], [0], [0], [1], [0, 0, 1, 1], [], []>} : vector<8x4xbf16>, vector<4x32xbf16>, vector<8x32xf32> -> vector<8x32xf32>
    %10 = arith.addf %4, %9 : vector<8x32xf32>
    %c0_10 = arith.constant 0 : index
    %c0_11 = arith.constant 0 : index
    %c0_12 = arith.constant 0 : index
    %11 = vector.load %arg6[%c0_10, %c0_11, %c0_12] : memref<1x1x32xf32, #tpu.memory_space<vmem>>, vector<1x1x32xf32>
    %12 = vector.shape_cast %11 : vector<1x1x32xf32> to vector<1x32xf32>
    %13 = vector.broadcast %12 : vector<1x32xf32> to vector<8x32xf32>
    %14 = arith.addf %10, %13 : vector<8x32xf32>
    %cst_13 = arith.constant 0.000000e+00 : f32
    %15 = vector.broadcast %cst_13 : f32 to vector<8x32xf32>
    %16 = arith.maximumf %14, %15 : vector<8x32xf32>
    %17 = arith.truncf %16 : vector<8x32xf32> to vector<8x32xbf16>
    %c0_14 = arith.constant 0 : index
    %c0_15 = arith.constant 0 : index
    %c0_16 = arith.constant 0 : index
    %18 = vector.load %arg7[%c0_14, %c0_15, %c0_16] : memref<1x32x32xbf16, #tpu.memory_space<vmem>>, vector<1x32x32xbf16>
    %19 = vector.shape_cast %18 : vector<1x32x32xbf16> to vector<32x32xbf16>
    %cst_17 = arith.constant dense<0.000000e+00> : vector<8x32xf32>
    %20 = tpu.matmul %17, %19, %cst_17 {dimension_numbers = #tpu.dot_dimension_numbers<[1], [0], [0], [1], [0, 0, 1, 1], [], []>} : vector<8x32xbf16>, vector<32x32xbf16>, vector<8x32xf32> -> vector<8x32xf32>
    %c0_18 = arith.constant 0 : index
    %c0_19 = arith.constant 0 : index
    %c0_20 = arith.constant 0 : index
    %21 = vector.load %arg8[%c0_18, %c0_19, %c0_20] : memref<1x1x32xf32, #tpu.memory_space<vmem>>, vector<1x1x32xf32>
    %22 = vector.shape_cast %21 : vector<1x1x32xf32> to vector<1x32xf32>
    %23 = vector.broadcast %22 : vector<1x32xf32> to vector<8x32xf32>
    %24 = arith.addf %20, %23 : vector<8x32xf32>
    %cst_21 = arith.constant 0.000000e+00 : f32
    %25 = vector.broadcast %cst_21 : f32 to vector<8x32xf32>
    %26 = arith.maximumf %24, %25 : vector<8x32xf32>
    %c0_22 = arith.constant 0 : index
    %c0_23 = arith.constant 0 : index
    %c0_24 = arith.constant 0 : index
    %27 = vector.load %arg9[%c0_22, %c0_23, %c0_24] : memref<1x1x32xbf16, #tpu.memory_space<vmem>>, vector<1x1x32xbf16>
    %28 = vector.shape_cast %27 : vector<1x1x32xbf16> to vector<1x32xbf16>
    %29 = arith.extf %28 : vector<1x32xbf16> to vector<1x32xf32>
    %30 = vector.broadcast %29 : vector<1x32xf32> to vector<8x32xf32>
    %31 = arith.mulf %26, %30 : vector<8x32xf32>
    %cst_25 = arith.constant dense<0.000000e+00> : vector<8xf32>
    %32 = vector.multi_reduction <add>, %31, %cst_25 [1] : vector<8x32xf32> to vector<8xf32>
    %33 = vector.shape_cast %32 : vector<8xf32> to vector<8x1xf32>
    %34 = arith.index_cast %arg0 : i32 to index
    %35 = memref.load %arg10[%34] : memref<2xf32, #tpu.memory_space<smem>>
    %36 = vector.broadcast %35 : f32 to vector<8x1xf32>
    %37 = arith.addf %33, %36 : vector<8x1xf32>
    %c0_26 = arith.constant 0 : index
    %c0_27 = arith.constant 0 : index
    %c0_28 = arith.constant 0 : index
    %38 = vector.load %arg11[%c0_26, %c0_27, %c0_28] : memref<1x8x1xf32, #tpu.memory_space<vmem>>, vector<1x8x1xf32>
    %39 = vector.shape_cast %38 : vector<1x8x1xf32> to vector<8x1xf32>
    %40 = vector.shape_cast %37 : vector<8x1xf32> to vector<1x8x1xf32>
    tpu.vector_store %arg11[%c0_26, %c0_27, %c0_28], %40 {strides = array<i32>} : memref<1x8x1xf32, #tpu.memory_space<vmem>>, vector<1x8x1xf32>,
    return
  }
  func.func @transform_0(%arg0: i32, %arg1: i32) -> (i32, i32) {
    %c0_i32 = arith.constant 0 : i32
    %c0_i32_0 = arith.constant 0 : i32
    return %arg1, %c0_i32 : i32, i32
  }
  func.func @transform_1(%arg0: i32, %arg1: i32) -> (i32, i32) {
    %c0_i32 = arith.constant 0 : i32
    %c0_i32_0 = arith.constant 0 : i32
    return %arg1, %c0_i32 : i32, i32
  }
  func.func @transform_2(%arg0: i32, %arg1: i32) -> (i32, i32, i32) {
    %c0_i32 = arith.constant 0 : i32
    %c0_i32_0 = arith.constant 0 : i32
    %c0_i32_1 = arith.constant 0 : i32
    return %arg0, %c0_i32, %c0_i32_0 : i32, i32, i32
  }
  func.func @transform_3(%arg0: i32, %arg1: i32) -> (i32, i32, i32) {
    %c0_i32 = arith.constant 0 : i32
    %c0_i32_0 = arith.constant 0 : i32
    %c0_i32_1 = arith.constant 0 : i32
    return %arg0, %c0_i32, %c0_i32_0 : i32, i32, i32
  }
  func.func @transform_4(%arg0: i32, %arg1: i32) -> (i32, i32, i32) {
    %c0_i32 = arith.constant 0 : i32
    %c0_i32_0 = arith.constant 0 : i32
    %c0_i32_1 = arith.constant 0 : i32
    return %arg0, %c0_i32, %c0_i32_0 : i32, i32, i32
  }
  func.func @transform_5(%arg0: i32, %arg1: i32) -> (i32, i32, i32) {
    %c0_i32 = arith.constant 0 : i32
    %c0_i32_0 = arith.constant 0 : i32
    %c0_i32_1 = arith.constant 0 : i32
    return %arg0, %c0_i32, %c0_i32_0 : i32, i32, i32
  }
  func.func @transform_6(%arg0: i32, %arg1: i32) -> (i32, i32, i32) {
    %c0_i32 = arith.constant 0 : i32
    %c0_i32_0 = arith.constant 0 : i32
    %c0_i32_1 = arith.constant 0 : i32
    return %arg0, %c0_i32, %c0_i32_0 : i32, i32, i32
  }
  func.func @transform_7(%arg0: i32, %arg1: i32) -> (i32, i32, i32) {
    %c0_i32 = arith.constant 0 : i32
    %c0_i32_0 = arith.constant 0 : i32
    %c0_i32_1 = arith.constant 0 : i32
    return %arg0, %c0_i32, %c0_i32_0 : i32, i32, i32
  }
  func.func @transform_8(%arg0: i32, %arg1: i32) -> i32 {
    %c0_i32 = arith.constant 0 : i32
    %c0_i32_0 = arith.constant 0 : i32
    return %c0_i32 : i32
  }
  func.func @transform_9(%arg0: i32, %arg1: i32) -> (i32, i32, i32) {
    %c0_i32 = arith.constant 0 : i32
    %c0_i32_0 = arith.constant 0 : i32
    return %arg0, %arg1, %c0_i32 : i32, i32, i32
  }
}

</mosaic_0001>

<llo_original>
// kernel: tpu_custom_call.1
$region0: #{tpu_custom_call.1}
  #allocation0 [shape = 'u32[]', space=smem, size = 0x4, offset = 0x4, fixed_abs, tag = 'smem constant byte address 0x4 - core index']
  #allocation1 [shape = 'u32[144,128]{1,0:T(1,128)}', space=vmem, size = 0x12000, scoped, tag = 'internal scratch']
  %s0 = inlined_call_operand.hbm [shape: f32[8,8], index: 0, kind: input, shape index: {}]
  %s1 = inlined_call_operand.vmem [shape: f32[8,4], index: 1, kind: input, shape index: {}]
  %s2 = inlined_call_operand.hbm [shape: bf16[2,8,32], index: 2, kind: input, shape index: {}]
  %s3 = inlined_call_operand.hbm [shape: bf16[2,4,32], index: 3, kind: input, shape index: {}]
  %s4 = inlined_call_operand.vmem [shape: f32[2,1,32], index: 4, kind: input, shape index: {}]
  %s5 = inlined_call_operand.vmem [shape: bf16[2,32,32], index: 5, kind: input, shape index: {}]
  %s6 = inlined_call_operand.vmem [shape: f32[2,1,32], index: 6, kind: input, shape index: {}]
  %s7 = inlined_call_operand.vmem [shape: bf16[2,1,32], index: 7, kind: input, shape index: {}]
  %s8 = inlined_call_operand.vmem [shape: f32[2], index: 8, kind: input, shape index: {}]
  %s9 = inlined_call_operand.vmem [shape: f32[2,8,1], index: 9, kind: output, shape index: {}]
  %s10 = sld [smem:[#allocation0]]
  $region85: #{tpu_custom_call.1} parent=0
    _
  %s12 = ssub.s32 1, %s10
  %s13 = scalar_select 0, %s12, %s10
  $region1: #{tpu_custom_call.1} parent=0
    #allocation2 [shape = 'u8[4096]{0}', space=vmem, size = 0x1000, scoped, tag = 'input window, operand 0, single buffered']
    #allocation3 [shape = 's32[2]{0}', space=sflag, size = 0x8, scoped, tag = 'scoped memory for tpu_custom_call.1']
    #allocation4 [shape = 's32[2]{0}', space=sflag, size = 0x8, scoped, tag = 'scoped memory for tpu_custom_call.1']
    #allocation5 [shape = 'u8[4096]{0}', space=vmem, size = 0x1000, scoped, tag = 'input window, operand 2']
    #allocation6 [shape = 's32[2]{0}', space=sflag, size = 0x8, scoped, tag = 'scoped memory for tpu_custom_call.1']
    #allocation7 [shape = 'u8[2048]{0}', space=vmem, size = 0x800, scoped, tag = 'input window, operand 3']
    #allocation8 [shape = 'u8[512]{0}', space=smem, size = 0x200, scoped, tag = 'input window, operand 8, single buffered']
    %14 = vsyncpa [#allocation3], 0
    %15 = vsyncpa [#allocation6], 0
    %s16 = scalar_lea.sflag [#allocation6], 1
    %17 = vsyncpa %s16, 0
    %18 = vsyncpa [#allocation4], 0
    loop: start=0, step=1, limit=4
    $region2: #{tpu_custom_call.1} parent=1 // loop_pre_header
      _
    $region3: #{tpu_custom_call.1} parent=1 // loop_header
      %s20 = sphi 0, %s24
      %p21 = scmp.ge.s32.totalorder %s20, 4
      %s27 = sphi 0, %s39
      %s28 = sphi 0, %s35
      %s29 = sphi 0, %s27
      %s30 = sphi 0, %s28
      %s31 = sphi 0, %s29
      %s32 = sphi 0, %s30
      %s42 = sphi 0, %s44
      %s45 = sphi 0, %s42
      %s46 = sphi 0, %s45
      %s62 = sphi 0, %s46
      %s68 = sphi 0, %s70
      %s71 = sphi 0, %s68
      %s72 = sphi 0, %s71
      %s88 = sphi 0, %s72
      %s94 = sphi 0, %s96
      %s97 = sphi 0, %s94
      %s98 = sphi 0, %s97
      %s114 = sphi 0, %s98
      %s120 = sphi 0, %s122
      %s123 = sphi 0, %s120
      %s124 = sphi 0, %s123
      %s140 = sphi 0, %s124
      %s146 = sphi 0, %s148
      %s149 = sphi 0, %s146
      %s150 = sphi 0, %s149
      %s166 = sphi 0, %s150
      %s172 = sphi 0, %s174
      %s175 = sphi 0, %s172
      %s176 = sphi 0, %s175
      %s192 = sphi 0, %s176
      %s198 = sphi 0, %s200
      %s201 = sphi 0, %s198
      %s202 = sphi 0, %s201
      %s218 = sphi 0, %s202
      %s224 = sphi 0, %s226
      %s227 = sphi 0, %s224
      %s228 = sphi 0, %s227
      %s244 = sphi 0, %s228
      %s248 = sphi 0, %s248
      %s250 = sphi 0, %s248
      %s251 = sphi 0, %s250
      %s265 = sphi 0, %s251
      %s273 = sphi 0, %s275
      %s276 = sphi 0, %s273
      %s277 = sphi 0, %s276
      %s293 = sphi 0, %s277
    $region4: #{tpu_custom_call.1} parent=1 // loop_header_branch
      %23 = sbr.rel (%p21) target = $region8
    $region5: #{tpu_custom_call.1} parent=1 // loop_body
      %s25 = ssub.s32 %s20, 1
      %s26 = ssub.s32 %s20, 2
      %s33 = sadd.s32 1, %s28
      %p34 = scmp.ge.s32.totalorder %s33, 1
      %s35 = scalar_select %p34, 0, %s33
      %s36 = sadd.s32 1, %s27
      %s37 = scalar_select %p34, %s36, %s27
      %p38 = scmp.ge.s32.totalorder %s37, 2
      %s39 = scalar_select %p38, 0, %s37
      %s40 = ssub.s32 %s28, %s35
      %p41 = scmp.eq.s32.totalorder %s40, 0
      %s43 = sadd.s32 %s42, 1
      %s44 = scalar_select %p41, %s42, %s43
      %p47 = pneg %p41
      %p48 = scmp.eq.s32.totalorder %s20, 1
      %p49 = por %p47, %p48
      %p50 = scmp.ne.s32.totalorder %s42, %s45
      %p51 = scmp.eq.s32.totalorder %s20, 0
      %p52 = por %p50, %p51
      %p53 = scmp.ne.s32.totalorder %s42, %s45
      %p54 = scmp.eq.s32.totalorder %s25, 1
      %p55 = por %p53, %p54
      %p56 = scmp.ne.s32.totalorder %s45, %s46
      %p57 = scmp.eq.s32.totalorder %s25, 0
      %p58 = por %p56, %p57
      %p59 = scmp.ne.s32.totalorder %s45, %s46
      %p60 = scmp.eq.s32.totalorder %s26, 1
      %p61 = por %p59, %p60
      %p63 = scmp.ne.s32.totalorder %s46, %s62
      %p64 = scmp.eq.s32.totalorder %s26, 0
      %p65 = por %p63, %p64
      %s66 = ssub.s32 %s28, %s35
      %p67 = scmp.eq.s32.totalorder %s66, 0
      %s69 = sadd.s32 %s68, 1
      %s70 = scalar_select %p67, %s68, %s69
      %p73 = pneg %p67
      %p74 = scmp.eq.s32.totalorder %s20, 1
      %p75 = por %p73, %p74
      %p76 = scmp.ne.s32.totalorder %s68, %s71
      %p77 = scmp.eq.s32.totalorder %s20, 0
      %p78 = por %p76, %p77
      %p79 = scmp.ne.s32.totalorder %s68, %s71
      %p80 = scmp.eq.s32.totalorder %s25, 1
      %p81 = por %p79, %p80
      %p82 = scmp.ne.s32.totalorder %s71, %s72
      %p83 = scmp.eq.s32.totalorder %s25, 0
      %p84 = por %p82, %p83
      %p85 = scmp.ne.s32.totalorder %s71, %s72
      %p86 = scmp.eq.s32.totalorder %s26, 1
      %p87 = por %p85, %p86
      %p89 = scmp.ne.s32.totalorder %s72, %s88
      %p90 = scmp.eq.s32.totalorder %s26, 0
      %p91 = por %p89, %p90
      %s92 = ssub.s32 %s27, %s39
      %p93 = scmp.eq.s32.totalorder %s92, 0
      %s95 = sadd.s32 %s94, 1
      %s96 = scalar_select %p93, %s94, %s95
      %p99 = pneg %p93
      %p100 = scmp.eq.s32.totalorder %s20, 1
      %p101 = por %p99, %p100
      %p102 = scmp.ne.s32.totalorder %s94, %s97
      %p103 = scmp.eq.s32.totalorder %s20, 0
      %p104 = por %p102, %p103
      %p105 = scmp.ne.s32.totalorder %s94, %s97
      %p106 = scmp.eq.s32.totalorder %s25, 1
      %p107 = por %p105, %p106
      %p108 = scmp.ne.s32.totalorder %s97, %s98
      %p109 = scmp.eq.s32.totalorder %s25, 0
      %p110 = por %p108, %p109
      %p111 = scmp.ne.s32.totalorder %s97, %s98
      %p112 = scmp.eq.s32.totalorder %s26, 1
      %p113 = por %p111, %p112
      %p115 = scmp.ne.s32.totalorder %s98, %s114
      %p116 = scmp.eq.s32.totalorder %s26, 0
      %p117 = por %p115, %p116
      %s118 = ssub.s32 %s27, %s39
      %p119 = scmp.eq.s32.totalorder %s118, 0
      %s121 = sadd.s32 %s120, 1
      %s122 = scalar_select %p119, %s120, %s121
      %p125 = pneg %p119
      %p126 = scmp.eq.s32.totalorder %s20, 1
      %p127 = por %p125, %p126
      %p128 = scmp.ne.s32.totalorder %s120, %s123
      %p129 = scmp.eq.s32.totalorder %s20, 0
      %p130 = por %p128, %p129
      %p131 = scmp.ne.s32.totalorder %s120, %s123
      %p132 = scmp.eq.s32.totalorder %s25, 1
      %p133 = por %p131, %p132
      %p134 = scmp.ne.s32.totalorder %s123, %s124
      %p135 = scmp.eq.s32.totalorder %s25, 0
      %p136 = por %p134, %p135
      %p137 = scmp.ne.s32.totalorder %s123, %s124
      %p138 = scmp.eq.s32.totalorder %s26, 1
      %p139 = por %p137, %p138
      %p141 = scmp.ne.s32.totalorder %s124, %s140
      %p142 = scmp.eq.s32.totalorder %s26, 0
      %p143 = por %p141, %p142
      %s144 = ssub.s32 %s27, %s39
      %p145 = scmp.eq.s32.totalorder %s144, 0
      %s147 = sadd.s32 %s146, 1
      %s148 = scalar_select %p145, %s146, %s147
      %p151 = pneg %p145
      %p152 = scmp.eq.s32.totalorder %s20, 1
      %p153 = por %p151, %p152
      %p154 = scmp.ne.s32.totalorder %s146, %s149
      %p155 = scmp.eq.s32.totalorder %s20, 0
      %p156 = por %p154, %p155
      %p157 = scmp.ne.s32.totalorder %s146, %s149
      %p158 = scmp.eq.s32.totalorder %s25, 1
      %p159 = por %p157, %p158
      %p160 = scmp.ne.s32.totalorder %s149, %s150
      %p161 = scmp.eq.s32.totalorder %s25, 0
      %p162 = por %p160, %p161
      %p163 = scmp.ne.s32.totalorder %s149, %s150
      %p164 = scmp.eq.s32.totalorder %s26, 1
      %p165 = por %p163, %p164
      %p167 = scmp.ne.s32.totalorder %s150, %s166
      %p168 = scmp.eq.s32.totalorder %s26, 0
      %p169 = por %p167, %p168
      %s170 = ssub.s32 %s27, %s39
      %p171 = scmp.eq.s32.totalorder %s170, 0
      %s173 = sadd.s32 %s172, 1
      %s174 = scalar_select %p171, %s172, %s173
      %p177 = pneg %p171
      %p178 = scmp.eq.s32.totalorder %s20, 1
      %p179 = por %p177, %p178
      %p180 = scmp.ne.s32.totalorder %s172, %s175
      %p181 = scmp.eq.s32.totalorder %s20, 0
      %p182 = por %p180, %p181
      %p183 = scmp.ne.s32.totalorder %s172, %s175
      %p184 = scmp.eq.s32.totalorder %s25, 1
      %p185 = por %p183, %p184
      %p186 = scmp.ne.s32.totalorder %s175, %s176
      %p187 = scmp.eq.s32.totalorder %s25, 0
      %p188 = por %p186, %p187
      %p189 = scmp.ne.s32.totalorder %s175, %s176
      %p190 = scmp.eq.s32.totalorder %s26, 1
      %p191 = por %p189, %p190
      %p193 = scmp.ne.s32.totalorder %s176, %s192
      %p194 = scmp.eq.s32.totalorder %s26, 0
      %p195 = por %p193, %p194
      %s196 = ssub.s32 %s27, %s39
      %p197 = scmp.eq.s32.totalorder %s196, 0
      %s199 = sadd.s32 %s198, 1
      %s200 = scalar_select %p197, %s198, %s199
      %p203 = pneg %p197
      %p204 = scmp.eq.s32.totalorder %s20, 1
      %p205 = por %p203, %p204
      %p206 = scmp.ne.s32.totalorder %s198, %s201
      %p207 = scmp.eq.s32.totalorder %s20, 0
      %p208 = por %p206, %p207
      %p209 = scmp.ne.s32.totalorder %s198, %s201
      %p210 = scmp.eq.s32.totalorder %s25, 1
      %p211 = por %p209, %p210
      %p212 = scmp.ne.s32.totalorder %s201, %s202
      %p213 = scmp.eq.s32.totalorder %s25, 0
      %p214 = por %p212, %p213
      %p215 = scmp.ne.s32.totalorder %s201, %s202
      %p216 = scmp.eq.s32.totalorder %s26, 1
      %p217 = por %p215, %p216
      %p219 = scmp.ne.s32.totalorder %s202, %s218
      %p220 = scmp.eq.s32.totalorder %s26, 0
      %p221 = por %p219, %p220
      %s222 = ssub.s32 %s27, %s39
      %p223 = scmp.eq.s32.totalorder %s222, 0
      %s225 = sadd.s32 %s224, 1
      %s226 = scalar_select %p223, %s224, %s225
      %p229 = pneg %p223
      %p230 = scmp.eq.s32.totalorder %s20, 1
      %p231 = por %p229, %p230
      %p232 = scmp.ne.s32.totalorder %s224, %s227
      %p233 = scmp.eq.s32.totalorder %s20, 0
      %p234 = por %p232, %p233
      %p235 = scmp.ne.s32.totalorder %s224, %s227
      %p236 = scmp.eq.s32.totalorder %s25, 1
      %p237 = por %p235, %p236
      %p238 = scmp.ne.s32.totalorder %s227, %s228
      %p239 = scmp.eq.s32.totalorder %s25, 0
      %p240 = por %p238, %p239
      %p241 = scmp.ne.s32.totalorder %s227, %s228
      %p242 = scmp.eq.s32.totalorder %s26, 1
      %p243 = por %p241, %p242
      %p245 = scmp.ne.s32.totalorder %s228, %s244
      %p246 = scmp.eq.s32.totalorder %s26, 0
      %p247 = por %p245, %p246
      %s249 = sadd.s32 %s248, 1
      %p252 = scmp.eq.s32.totalorder %s20, 1
      %p253 = scmp.ne.s32.totalorder %s248, %s250
      %p254 = scmp.eq.s32.totalorder %s20, 0
      %p255 = por %p253, %p254
      %p256 = scmp.ne.s32.totalorder %s248, %s250
      %p257 = scmp.eq.s32.totalorder %s25, 1
      %p258 = por %p256, %p257
      %p259 = scmp.ne.s32.totalorder %s250, %s251
      %p260 = scmp.eq.s32.totalorder %s25, 0
      %p261 = por %p259, %p260
      %p262 = scmp.ne.s32.totalorder %s250, %s251
      %p263 = scmp.eq.s32.totalorder %s26, 1
      %p264 = por %p262, %p263
      %p266 = scmp.ne.s32.totalorder %s251, %s265
      %p267 = scmp.eq.s32.totalorder %s26, 0
      %p268 = por %p266, %p267
      %s269 = ssub.s32 %s27, %s39
      %s270 = ssub.s32 %s28, %s35
      %s271 = sor.u32 %s269, %s270
      %p272 = scmp.eq.s32.totalorder %s271, 0
      %s274 = sadd.s32 %s273, 1
      %s275 = scalar_select %p272, %s273, %s274
      %p278 = pneg %p272
      %p279 = scmp.eq.s32.totalorder %s20, 1
      %p280 = por %p278, %p279
      %p281 = scmp.ne.s32.totalorder %s273, %s276
      %p282 = scmp.eq.s32.totalorder %s20, 0
      %p283 = por %p281, %p282
      %p284 = scmp.ne.s32.totalorder %s273, %s276
      %p285 = scmp.eq.s32.totalorder %s25, 1
      %p286 = por %p284, %p285
      %p287 = scmp.ne.s32.totalorder %s276, %s277
      %p288 = scmp.eq.s32.totalorder %s25, 0
      %p289 = por %p287, %p288
      %p290 = scmp.ne.s32.totalorder %s276, %s277
      %p291 = scmp.eq.s32.totalorder %s26, 1
      %p292 = por %p290, %p291
      %p294 = scmp.ne.s32.totalorder %s277, %s293
      %p295 = scmp.eq.s32.totalorder %s26, 0
      %p296 = por %p294, %p295
      %p297 = scmp.le.s32.totalorder 1, %s20
      %p298 = scmp.lt.s32.totalorder %s20, 3
      %p299 = pnand %p297, %p298
      %p300 = pneg %p299
      // Predicated region
      $region9: #{tpu_custom_call.1} parent=5 // pred_check
        _
      $region10: #{tpu_custom_call.1} parent=5 // pred_check_branch
        %302 = sbr.rel (%p299) target = $region12
      $region11: #{tpu_custom_call.1} parent=5 // pred_region
        %s303 = ssub.s32 %s20, 1
        // Predicated region
        $region13: #{tpu_custom_call.1} parent=11 // pred_check
          %p304 = pneg %p58
        $region14: #{tpu_custom_call.1} parent=11 // pred_check_branch
          %306 = sbr.rel (%p304) target = $region16
        $region15: #{tpu_custom_call.1} parent=11 // pred_region
          %s308 = ssub.s32 128, 128
          %309 = vsyncadd [#allocation3], %s308
          %s310 = smul.addr %s30, 128
          %s311 = scalar_lea.hbm %s0, %s310
          %s313 = sshll.u32 [#allocation2], 4
          %s314 = int_to_ptr.vmem [resolvable:$true] %s313
          %316 = dma.hbm_to_vmem [thread:$0]  %s311, 128, %s314, [#allocation3]
        $region16: #{tpu_custom_call.1} parent=11 // pred_fallthru
          _
        // Predicated region
        $region17: #{tpu_custom_call.1} parent=11 // pred_check
          %p317 = pneg %p84
        $region18: #{tpu_custom_call.1} parent=11 // pred_check_branch
          %319 = sbr.rel (%p317) target = $region20
        $region19: #{tpu_custom_call.1} parent=11 // pred_region
          %p320 = scmp.lt.s32.totalorder %s30, 0
          %s321 = scalar_select %p320, %s30, 0
          %s322 = smul.addr %s321, 8
          %s323 = scalar_lea.vmem %s1, %s322
        $region20: #{tpu_custom_call.1} parent=11 // pred_fallthru
          _
        // Predicated region
        $region21: #{tpu_custom_call.1} parent=11 // pred_check
          %p324 = pneg %p261
        $region22: #{tpu_custom_call.1} parent=11 // pred_check_branch
          %326 = sbr.rel (%p324) target = $region24
        $region23: #{tpu_custom_call.1} parent=11 // pred_region
          %s328 = ssub.s32 16, 16
          %329 = vsyncadd [#allocation4], %s328
          %s331 = sshll.u32 %s8, 4
          %s332 = int_to_ptr.vmem [resolvable:$true] %s331
          %334 = dma.vmem_to_smem %s332, 16, [#allocation8], [#allocation4]
        $region24: #{tpu_custom_call.1} parent=11 // pred_fallthru
          _
      $region12: #{tpu_custom_call.1} parent=5 // pred_fallthru
        _
      %p335 = scmp.lt.s32.totalorder %s20, 2
      // Predicated region
      $region25: #{tpu_custom_call.1} parent=5 // pred_check
        %p336 = pneg %p335
      $region26: #{tpu_custom_call.1} parent=5 // pred_check_branch
        %338 = sbr.rel (%p336) target = $region28
      $region27: #{tpu_custom_call.1} parent=5 // pred_region
        // Predicated region
        $region29: #{tpu_custom_call.1} parent=27 // pred_check
          %p339 = pneg %p104
        $region30: #{tpu_custom_call.1} parent=27 // pred_check_branch
          %341 = sbr.rel (%p339) target = $region32
        $region31: #{tpu_custom_call.1} parent=27 // pred_region
          %s342 = sand.u32 %s20, 1
          %s343 = scalar_lea.sflag [#allocation6], %s342
          %s344 = sand.u32 %s94, 1
          %s345 = smul.addr %s344, 4
          %s346 = scalar_lea.vmem [#allocation5], %s345
          %s348 = ssub.s32 64, 64
          %349 = vsyncadd %s343, %s348
          %s350 = smul.addr %s27, 64
          %s351 = scalar_lea.hbm %s2, %s350
          %s353 = sshll.u32 %s346, 4
          %s354 = int_to_ptr.vmem [resolvable:$true] %s353
          %356 = dma.hbm_to_vmem [thread:$0]  %s351, 64, %s354, %s343
        $region32: #{tpu_custom_call.1} parent=27 // pred_fallthru
          _
        // Predicated region
        $region33: #{tpu_custom_call.1} parent=27 // pred_check
          %p357 = pneg %p130
        $region34: #{tpu_custom_call.1} parent=27 // pred_check_branch
          %359 = sbr.rel (%p357) target = $region36
        $region35: #{tpu_custom_call.1} parent=27 // pred_region
          %s360 = sand.u32 %s20, 1
          %s361 = scalar_lea.sflag [#allocation6], %s360
          %s362 = sand.u32 %s120, 1
          %s363 = smul.addr %s362, 2
          %s364 = scalar_lea.vmem [#allocation7], %s363
          %s366 = ssub.s32 32, 32
          %367 = vsyncadd %s361, %s366
          %s368 = smul.addr %s27, 32
          %s369 = scalar_lea.hbm %s3, %s368
          %s371 = sshll.u32 %s364, 4
          %s372 = int_to_ptr.vmem [resolvable:$true] %s371
          %374 = dma.hbm_to_vmem [thread:$0]  %s369, 32, %s372, %s361
        $region36: #{tpu_custom_call.1} parent=27 // pred_fallthru
          _
        // Predicated region
        $region37: #{tpu_custom_call.1} parent=27 // pred_check
          %p375 = pneg %p156
        $region38: #{tpu_custom_call.1} parent=27 // pred_check_branch
          %377 = sbr.rel (%p375) target = $region40
        $region39: #{tpu_custom_call.1} parent=27 // pred_region
          %p378 = scmp.lt.s32.totalorder %s27, 1
          %s379 = scalar_select %p378, %s27, 1
          %s380 = scalar_lea.vmem %s4, %s379
        $region40: #{tpu_custom_call.1} parent=27 // pred_fallthru
          _
        // Predicated region
        $region41: #{tpu_custom_call.1} parent=27 // pred_check
          %p381 = pneg %p182
        $region42: #{tpu_custom_call.1} parent=27 // pred_check_branch
          %383 = sbr.rel (%p381) target = $region44
        $region43: #{tpu_custom_call.1} parent=27 // pred_region
          %p384 = scmp.lt.s32.totalorder %s27, 1
          %s385 = scalar_select %p384, %s27, 1
          %s386 = smul.addr %s385, 4
          %s387 = smul.addr %s386, 4
          %s388 = scalar_lea.vmem %s5, %s387
        $region44: #{tpu_custom_call.1} parent=27 // pred_fallthru
          _
        // Predicated region
        $region45: #{tpu_custom_call.1} parent=27 // pred_check
          %p389 = pneg %p208
        $region46: #{tpu_custom_call.1} parent=27 // pred_check_branch
          %391 = sbr.rel (%p389) target = $region48
        $region47: #{tpu_custom_call.1} parent=27 // pred_region
          %p392 = scmp.lt.s32.totalorder %s27, 1
          %s393 = scalar_select %p392, %s27, 1
          %s394 = scalar_lea.vmem %s6, %s393
        $region48: #{tpu_custom_call.1} parent=27 // pred_fallthru
          _
        // Predicated region
        $region49: #{tpu_custom_call.1} parent=27 // pred_check
          %p395 = pneg %p234
        $region50: #{tpu_custom_call.1} parent=27 // pred_check_branch
          %397 = sbr.rel (%p395) target = $region52
        $region51: #{tpu_custom_call.1} parent=27 // pred_region
          %p398 = scmp.lt.s32.totalorder %s27, 1
          %s399 = scalar_select %p398, %s27, 1
          %s400 = scalar_lea.vmem %s7, %s399
        $region52: #{tpu_custom_call.1} parent=27 // pred_fallthru
          _
      $region28: #{tpu_custom_call.1} parent=5 // pred_fallthru
        _
      %p401 = scmp.le.s32.totalorder 1, %s20
      %p402 = scmp.lt.s32.totalorder %s20, 3
      %p403 = pnand %p401, %p402
      %p404 = pneg %p403
      // Predicated region
      $region53: #{tpu_custom_call.1} parent=5 // pred_check
        _
      $region54: #{tpu_custom_call.1} parent=5 // pred_check_branch
        %406 = sbr.rel (%p403) target = $region56
      $region55: #{tpu_custom_call.1} parent=5 // pred_region
        %s407 = ssub.s32 %s20, 1
        // Predicated region
        $region57: #{tpu_custom_call.1} parent=55 // pred_check
          %p408 = pneg %p58
        $region58: #{tpu_custom_call.1} parent=55 // pred_check_branch
          %410 = sbr.rel (%p408) target = $region60
        $region59: #{tpu_custom_call.1} parent=55 // pred_region
          %411 = dma.done [#allocation3], 128
        $region60: #{tpu_custom_call.1} parent=55 // pred_fallthru
          _
        %s412 = sand.u32 %s25, 1
        %s413 = scalar_lea.sflag [#allocation6], %s412
        %s414 = sand.u32 %s97, 1
        %s415 = smul.addr %s414, 4
        %s416 = scalar_lea.vmem [#allocation5], %s415
        // Predicated region
        $region61: #{tpu_custom_call.1} parent=55 // pred_check
          %p417 = pneg %p110
        $region62: #{tpu_custom_call.1} parent=55 // pred_check_branch
          %419 = sbr.rel (%p417) target = $region64
        $region63: #{tpu_custom_call.1} parent=55 // pred_region
          %420 = dma.done %s413, 64
        $region64: #{tpu_custom_call.1} parent=55 // pred_fallthru
          _
        %s421 = sand.u32 %s25, 1
        %s422 = scalar_lea.sflag [#allocation6], %s421
        %s423 = sand.u32 %s123, 1
        %s424 = smul.addr %s423, 2
        %s425 = scalar_lea.vmem [#allocation7], %s424
        // Predicated region
        $region65: #{tpu_custom_call.1} parent=55 // pred_check
          %p426 = pneg %p136
        $region66: #{tpu_custom_call.1} parent=55 // pred_check_branch
          %428 = sbr.rel (%p426) target = $region68
        $region67: #{tpu_custom_call.1} parent=55 // pred_region
          %429 = dma.done %s422, 32
        $region68: #{tpu_custom_call.1} parent=55 // pred_fallthru
          _
        // Predicated region
        $region69: #{tpu_custom_call.1} parent=55 // pred_check
          %p430 = pneg %p261
        $region70: #{tpu_custom_call.1} parent=55 // pred_check_branch
          %432 = sbr.rel (%p430) target = $region72
        $region71: #{tpu_custom_call.1} parent=55 // pred_region
          %433 = dma.done [#allocation4], 16
        $region72: #{tpu_custom_call.1} parent=55 // pred_fallthru
          _
        %434 = sfence
        %p435 = pneg %p58
        %p436 = pneg %p55
        %p437 = scmp.lt.s32.totalorder %s30, 0
        %s438 = scalar_select %p437, %s30, 0
        %s439 = smul.addr %s438, 8
        %s440 = scalar_lea.vmem %s1, %s439
        %p441 = pneg %p84
        %p442 = pneg %p81
        %s443 = sand.u32 %s25, 1
        %s444 = scalar_lea.sflag [#allocation6], %s443
        %s445 = sand.u32 %s97, 1
        %s446 = smul.addr %s445, 4
        %s447 = scalar_lea.vmem [#allocation5], %s446
        %p448 = pneg %p110
        %p449 = pneg %p107
        %s450 = sand.u32 %s25, 1
        %s451 = scalar_lea.sflag [#allocation6], %s450
        %s452 = sand.u32 %s123, 1
        %s453 = smul.addr %s452, 2
        %s454 = scalar_lea.vmem [#allocation7], %s453
        %p455 = pneg %p136
        %p456 = pneg %p133
        %p457 = scmp.lt.s32.totalorder %s29, 1
        %s458 = scalar_select %p457, %s29, 1
        %s459 = scalar_lea.vmem %s4, %s458
        %p460 = pneg %p162
        %p461 = pneg %p159
        %p462 = scmp.lt.s32.totalorder %s29, 1
        %s463 = scalar_select %p462, %s29, 1
        %s464 = smul.addr %s463, 4
        %s465 = smul.addr %s464, 4
        %s466 = scalar_lea.vmem %s5, %s465
        %p467 = pneg %p188
        %p468 = pneg %p185
        %p469 = scmp.lt.s32.totalorder %s29, 1
        %s470 = scalar_select %p469, %s29, 1
        %s471 = scalar_lea.vmem %s6, %s470
        %p472 = pneg %p214
        %p473 = pneg %p211
        %p474 = scmp.lt.s32.totalorder %s29, 1
        %s475 = scalar_select %p474, %s29, 1
        %s476 = scalar_lea.vmem %s7, %s475
        %p477 = pneg %p240
        %p478 = pneg %p237
        %p479 = pneg %p261
        %p480 = pneg %p258
        %p481 = pneg %p289
        %p482 = pneg %p286
        %p483 = scmp.lt.s32.totalorder %s29, 1
        %s484 = scalar_select %p483, %s29, 1
        %p485 = scmp.lt.s32.totalorder %s30, 0
        %s486 = scalar_select %p485, %s30, 0
        %s487 = sadd.s32 %s486, %s484
        %s488 = smul.addr %s487, 8
        %s489 = scalar_lea.vmem %s9, %s488
        %p490 = scmp.lt.s32.totalorder %s30, 0
        %s491 = scalar_select %p490, %s30, 0
        %s492 = smul.addr %s491, 8
        %s493 = scalar_lea.vmem %s1, %s492
        %p494 = scmp.lt.s32.totalorder %s29, 1
        %s495 = scalar_select %p494, %s29, 1
        %s496 = scalar_lea.vmem %s4, %s495
        %p497 = scmp.lt.s32.totalorder %s29, 1
        %s498 = scalar_select %p497, %s29, 1
        %s499 = smul.addr %s498, 4
        %s500 = smul.addr %s499, 4
        %s501 = scalar_lea.vmem %s5, %s500
        %p502 = scmp.lt.s32.totalorder %s29, 1
        %s503 = scalar_select %p502, %s29, 1
        %s504 = scalar_lea.vmem %s6, %s503
        %p505 = scmp.lt.s32.totalorder %s29, 1
        %s506 = scalar_select %p505, %s29, 1
        %s507 = scalar_lea.vmem %s7, %s506
        %p508 = scmp.lt.s32.totalorder %s29, 1
        %s509 = scalar_select %p508, %s29, 1
        %p510 = scmp.lt.s32.totalorder %s30, 0
        %s511 = scalar_select %p510, %s30, 0
        %s512 = sadd.s32 %s511, %s509
        %s513 = smul.addr %s512, 8
        %s514 = scalar_lea.vmem %s9, %s513
        %v516 = vld [vmem:[#allocation2] sm:$0xff]
        %v517 = vpack.c.bf16 %v516, %v516
        %v518 = vld [vmem:[%s416] sm:$0xf]
        %v519 = vld [vmem:[%s493] sm:$0xff]
        %v520 = vpack.c.bf16 %v519, %v519
        %v521 = vld [vmem:[%s425] sm:$0x3]
        %vm522 = vcmask 31744
        %v524 = vsel %vm522, %v520, 0
        %vm526 = vcmask 1041408
        %v528 = vsel %vm526, %v521, 0
        %530 = vmatprep.subr.bf16.mxu0 0
        %531 = vmatpush1.bf16.msra.mxu0 %v528
        %532 = vmatprep.subr.bf16.mxu0 0
        %533 = vmatpush1.bf16.msra.mxu0 0
        %534 = vmatprep.subr.bf16.mxu0 0
        %535 = vmatpush1.bf16.msra.mxu0 0
        %536 = vmatprep.subr.bf16.mxu0 0
        %537 = vmatpush1.bf16.msra.mxu0 0
        %538 = vmatprep.subr.bf16.mxu0 0
        %539 = vmatpush1.bf16.msra.mxu0 0
        %540 = vmatprep.subr.bf16.mxu0 0
        %541 = vmatpush1.bf16.msra.mxu0 0
        %542 = vmatprep.subr.bf16.mxu0 0
        %543 = vmatpush1.bf16.msra.mxu0 0
        %544 = vmatprep.subr.bf16.mxu0 0
        %545 = vmatpush1.bf16.msra.mxu0 0
        %546 = vmatprep.subr.bf16.mxu0 0
        %547 = vmatpush1.bf16.msra.mxu0 0
        %548 = vmatprep.subr.bf16.mxu0 0
        %549 = vmatpush1.bf16.msra.mxu0 0
        %550 = vmatprep.subr.bf16.mxu0 0
        %551 = vmatpush1.bf16.msra.mxu0 0
        %552 = vmatprep.subr.bf16.mxu0 0
        %553 = vmatpush1.bf16.msra.mxu0 0
        %554 = vmatprep.subr.bf16.mxu0 0
        %555 = vmatpush1.bf16.msra.mxu0 0
        %556 = vmatprep.subr.bf16.mxu0 0
        %557 = vmatpush1.bf16.msra.mxu0 0
        %558 = vmatprep.subr.bf16.mxu0 0
        %559 = vmatpush1.bf16.msra.mxu0 0
        %560 = vmatprep.subr.bf16.mxu0 0
        %561 = vmatpush1.bf16.msra.mxu0 0
        %562 = vmatprep.mubr.bf16.mxu0 0
        %563 = vmatmul.mubr.bf16.gmra.mrb[0].mxu0 %v524
        %v564 = vpop.f32.mrb[0].mxu0
        %v565 = vadd.f32 0.0, %v564
        %v566 = vpop.f32.mrb[0].mxu0
        %v567 = vpop.f32.mrb[0].mxu0
        %v568 = vpop.f32.mrb[0].mxu0
        %569 = vdwg.mxu0
        %vm570 = vcmask 64512
        %v572 = vsel %vm570, %v517, 0
        %vm574 = vcmask 1043456
        %v576 = vsel %vm574, %v518, 0
        %578 = vmatprep.subr.bf16.mxu0 0
        %579 = vmatpush1.bf16.msra.mxu0 %v576
        %580 = vmatprep.subr.bf16.mxu0 0
        %581 = vmatpush1.bf16.msra.mxu0 0
        %582 = vmatprep.subr.bf16.mxu0 0
        %583 = vmatpush1.bf16.msra.mxu0 0
        %584 = vmatprep.subr.bf16.mxu0 0
        %585 = vmatpush1.bf16.msra.mxu0 0
        %586 = vmatprep.subr.bf16.mxu0 0
        %587 = vmatpush1.bf16.msra.mxu0 0
        %588 = vmatprep.subr.bf16.mxu0 0
        %589 = vmatpush1.bf16.msra.mxu0 0
        %590 = vmatprep.subr.bf16.mxu0 0
        %591 = vmatpush1.bf16.msra.mxu0 0
        %592 = vmatprep.subr.bf16.mxu0 0
        %593 = vmatpush1.bf16.msra.mxu0 0
        %594 = vmatprep.subr.bf16.mxu0 0
        %595 = vmatpush1.bf16.msra.mxu0 0
        %596 = vmatprep.subr.bf16.mxu0 0
        %597 = vmatpush1.bf16.msra.mxu0 0
        %598 = vmatprep.subr.bf16.mxu0 0
        %599 = vmatpush1.bf16.msra.mxu0 0
        %600 = vmatprep.subr.bf16.mxu0 0
        %601 = vmatpush1.bf16.msra.mxu0 0
        %602 = vmatprep.subr.bf16.mxu0 0
        %603 = vmatpush1.bf16.msra.mxu0 0
        %604 = vmatprep.subr.bf16.mxu0 0
        %605 = vmatpush1.bf16.msra.mxu0 0
        %606 = vmatprep.subr.bf16.mxu0 0
        %607 = vmatpush1.bf16.msra.mxu0 0
        %608 = vmatprep.subr.bf16.mxu0 0
        %609 = vmatpush1.bf16.msra.mxu0 0
        %610 = vmatprep.mubr.bf16.mxu0 0
        %611 = vmatmul.mubr.bf16.gmra.mrb[0].mxu0 %v572
        %v612 = vpop.f32.mrb[0].mxu0
        %v613 = vadd.f32 %v565, %v612
        %v614 = vpop.f32.mrb[0].mxu0
        %v615 = vpop.f32.mrb[0].mxu0
        %v616 = vpop.f32.mrb[0].mxu0
        %617 = vdwg.mxu0
        %v618 = vld [vmem:[%s496] sm:$0x1]
        %v620 = vlaneseq
        %v621 = vshrl.u32 %v620, 7
        %v622 = vsub.s32 0, %v621
        %v623 = vrot.slane %v618, %v622
        %v625 = vadd.f32 %v613, %v623
        %v626 = vmax.f32 %v625, 0.0
        %v627 = vpack.c.bf16 %v626, %v626
        %v628 = vld [vmem:[%s501] sm:$0xf]
        %v629 = vld [vmem:[%s501 + $0x4] sm:$0xf]
        %v630 = vld [vmem:[%s501 + $0x8] sm:$0xf]
        %v631 = vld [vmem:[%s501 + $0xc] sm:$0xf]
        %v632 = vld [vmem:[%s504] sm:$0x1]
        %v634 = vlaneseq
        %v635 = vshrl.u32 %v634, 7
        %v636 = vsub.s32 0, %v635
        %v637 = vrot.slane %v632, %v636
        %v643 = vunpack.c.l.b16 %v628
        %v644 = vunpack.c.l.b16 %v629
        %v645 = vunpack.c.l.b16 %v630
        %v646 = vunpack.c.l.b16 %v631
        %v647 = vpack.c.b16 %v644, %v643
        %v648 = vpack.c.b16 %v646, %v645
        %vm651 = vcmask 261120
        %v653 = vsel %vm651, %v627, 0
        %655 = vmatprep.subr.bf16.mxu0 0
        %656 = vmatpush1.bf16.msra.mxu0 %v647
        %657 = vmatprep.subr.bf16.mxu0 0
        %658 = vmatpush1.bf16.msra.mxu0 %v648
        %659 = vmatprep.subr.bf16.mxu0 0
        %660 = vmatpush1.bf16.msra.mxu0 0
        %661 = vmatprep.subr.bf16.mxu0 0
        %662 = vmatpush1.bf16.msra.mxu0 0
        %663 = vmatprep.subr.bf16.mxu0 0
        %664 = vmatpush1.bf16.msra.mxu0 0
        %665 = vmatprep.subr.bf16.mxu0 0
        %666 = vmatpush1.bf16.msra.mxu0 0
        %667 = vmatprep.subr.bf16.mxu0 0
        %668 = vmatpush1.bf16.msra.mxu0 0
        %669 = vmatprep.subr.bf16.mxu0 0
        %670 = vmatpush1.bf16.msra.mxu0 0
        %671 = vmatprep.subr.bf16.mxu0 0
        %672 = vmatpush1.bf16.msra.mxu0 0
        %673 = vmatprep.subr.bf16.mxu0 0
        %674 = vmatpush1.bf16.msra.mxu0 0
        %675 = vmatprep.subr.bf16.mxu0 0
        %676 = vmatpush1.bf16.msra.mxu0 0
        %677 = vmatprep.subr.bf16.mxu0 0
        %678 = vmatpush1.bf16.msra.mxu0 0
        %679 = vmatprep.subr.bf16.mxu0 0
        %680 = vmatpush1.bf16.msra.mxu0 0
        %681 = vmatprep.subr.bf16.mxu0 0
        %682 = vmatpush1.bf16.msra.mxu0 0
        %683 = vmatprep.subr.bf16.mxu0 0
        %684 = vmatpush1.bf16.msra.mxu0 0
        %685 = vmatprep.subr.bf16.mxu0 0
        %686 = vmatpush1.bf16.msra.mxu0 0
        %687 = vmatprep.mubr.bf16.mxu0 0
        %688 = vmatmul.mubr.bf16.gmra.mrb[0].mxu0 %v653
        %v689 = vpop.f32.mrb[0].mxu0
        %v690 = vadd.f32 %v637, %v689
        %v691 = vpop.f32.mrb[0].mxu0
        %v692 = vpop.f32.mrb[0].mxu0
        %v693 = vpop.f32.mrb[0].mxu0
        %694 = vdwg.mxu0
        %v695 = vmax.f32 %v690, 0.0
        %v696 = vld [vmem:[%s507] sm:$0x1]
        %v697 = vunpack.c.l.bf16 %v696
        %v698 = vlaneseq
        %v699 = vshrl.u32 %v698, 7
        %v700 = vsub.s32 0, %v699
        %v701 = vrot.slane %v697, %v700
        %v702 = vmul.f32 %v695, %v701
        %v703 = vsel %vm651, %v702, 0.0
        %704 = vadd.xlane.f32.xlu0 %v703
        %v705 = vpop.xlane.xlu0 %704
        %s706 = sld [smem:[#allocation8 + %s29]]
        %v707 = vstv %s706
        %v708 = vadd.f32 %v705, %v707
        %vm709 = vcmask 7168
        %710 = vst.msk [vmem:[%s514] sm:$0xff] %vm709, %v708
        %p711 = scmp.lt.s32.totalorder %s29, 1
        %s712 = scalar_select %p711, %s29, 1
        %p713 = scmp.lt.s32.totalorder %s30, 0
        %s714 = scalar_select %p713, %s30, 0
        %s715 = sadd.s32 %s714, %s712
        %s716 = smul.addr %s715, 8
        %s717 = scalar_lea.vmem %s9, %s716
        // Predicated region
        $region73: #{tpu_custom_call.1} parent=55 // pred_check
          %p718 = pneg %p286
        $region74: #{tpu_custom_call.1} parent=55 // pred_check_branch
          %720 = sbr.rel (%p718) target = $region76
        $region75: #{tpu_custom_call.1} parent=55 // pred_region
          _
        $region76: #{tpu_custom_call.1} parent=55 // pred_fallthru
          _
      $region56: #{tpu_custom_call.1} parent=5 // pred_fallthru
        _
      %p721 = scmp.le.s32.totalorder 2, %s20
      // Predicated region
      $region77: #{tpu_custom_call.1} parent=5 // pred_check
        %p722 = pneg %p721
      $region78: #{tpu_custom_call.1} parent=5 // pred_check_branch
        %724 = sbr.rel (%p722) target = $region80
      $region79: #{tpu_custom_call.1} parent=5 // pred_region
        %s725 = ssub.s32 %s20, 2
        // Predicated region
        $region81: #{tpu_custom_call.1} parent=79 // pred_check
          %p726 = pneg %p292
        $region82: #{tpu_custom_call.1} parent=79 // pred_check_branch
          %728 = sbr.rel (%p726) target = $region84
        $region83: #{tpu_custom_call.1} parent=79 // pred_region
          %p729 = scmp.lt.s32.totalorder %s31, 1
          %s730 = scalar_select %p729, %s31, 1
          %p731 = scmp.lt.s32.totalorder %s32, 0
          %s732 = scalar_select %p731, %s32, 0
          %s733 = sadd.s32 %s732, %s730
          %s734 = smul.addr %s733, 8
          %s735 = scalar_lea.vmem %s9, %s734
        $region84: #{tpu_custom_call.1} parent=79 // pred_fallthru
          _
      $region80: #{tpu_custom_call.1} parent=5 // pred_fallthru
        _
    $region6: #{tpu_custom_call.1} parent=1 // loop_footer
      %s24 = sadd.s32 1, %s20
    $region7: #{tpu_custom_call.1} parent=1 // loop_footer_branch
      %19 = sbr.rel target = $region3
    $region8: #{tpu_custom_call.1} parent=1 // loop_exit
      _
    %736 = vsyncpa [#allocation3], 1
    %s737 = scalar_lea.sflag [#allocation3], 1
    %738 = vsyncpa %s737, 1
    %739 = vsyncpa [#allocation6], 1
    %s740 = scalar_lea.sflag [#allocation6], 1
    %741 = vsyncpa %s740, 1
    %742 = vsyncpa [#allocation4], 1
    %s743 = scalar_lea.sflag [#allocation4], 1
    %744 = vsyncpa %s743, 1

</llo_original>
